<compile_context>
chip_gen: v7x
topology: tpu7x:2x2x1
jax: 0.10.0
libtpu: 0.0.40
codegen_flags: <defaults>
</compile_context>

<pallas_src>
import jax
import jax.numpy as jnp
from jax.experimental import pallas as pl
from jax.experimental.pallas import tpu as pltpu

K_PAD = 384   # ceil(300 / 128) * 128
H_PAD = 128   # conv output channels (8) padded to one lane group


def _fused_forward_kernel(x_ref, wc_ref, bc_ref, wl_ref, bl_ref, o_ref):
    # Conv-as-matmul on the MXU (+ bias) then ReLU on the VPU.
    h = jnp.dot(x_ref[...], wc_ref[...], preferred_element_type=jnp.float32)
    h = jnp.maximum(h + bc_ref[...], 0.0)          # bc: (1, H_PAD) broadcasts over rows
    # Dropout: PyTorch eval-mode identity.
    # TODO(synk): training-mode stochastic dropout (pltpu.prng_random_bits +
    # 1/(1-p) scaling) cannot match torch's RNG stream; omitted (identity).
    # Linear(8, 1) as a lane reduction (O=1): no second MXU pass needed.
    red = jnp.sum(h * wl_ref[...], axis=-1, keepdims=True)   # (TM, 1)
    # Lane-dense store: result replicated across all 128 lanes.
    o_ref[...] = red + bl_ref[...]


def _pad_to(a, shape):
    pads = [(0, s - d) for d, s in zip(a.shape, shape)]
    return jnp.pad(a, pads)


def prepare_params(conv_w, conv_b, lin_w, lin_b):
    """One-time weight prep: reshape/transpose/cast/pad (hoisted out of the
    per-call path). Row-major flatten matches PyTorch's (out,in,kh,kw) layout."""
    H, C, KH, KW = conv_w.shape                    # (8, 3, 10, 10)
    K = C * KH * KW                                # 300
    wc_p = _pad_to(conv_w.reshape(H, K).T.astype(jnp.float32), (K_PAD, H_PAD))
    bc_p = _pad_to(conv_b.astype(jnp.float32).reshape(1, H), (1, H_PAD))
    # Linear weight as a single padded row (lin_w is (1, 8)).
    wl_p = _pad_to(lin_w.astype(jnp.float32).reshape(1, H), (1, H_PAD))
    # Linear bias replicated across lanes so the output stays lane-dense.
    bl_p = jnp.broadcast_to(lin_b.astype(jnp.float32).reshape(1, 1), (1, H_PAD))
    return wc_p, bc_p, wl_p, bl_p


def dummy_model_forward(x, wc_p, bc_p, wl_p, bl_p):
    """x: (N, 3, 10, 10) f32 NCHW.  Returns (N, 1) f32."""
    N = x.shape[0]
    K = x.shape[1] * x.shape[2] * x.shape[3]
    x_flat = x.reshape(N, K).astype(jnp.float32)

    # Batch tile: large tiles amortize per-step grid overhead at scale; for
    # small N just round up to a sublane multiple.
    TM = 256
    if N <= TM:
        TM = max(8, ((N + 7) // 8) * 8)
    N_pad = ((N + TM - 1) // TM) * TM

    x_p = _pad_to(x_flat, (N_pad, K_PAD))

    out_p = pl.pallas_call(
        _fused_forward_kernel,
        out_shape=jax.ShapeDtypeStruct((N_pad, H_PAD), jnp.float32),
        grid=(N_pad // TM,),
        in_specs=[
            # Streaming x tile per grid step.
            # (If DMA latency shows up at very large N, pipeline_mode=
            #  pl.Buffered(3) here is the cheap next tune.)
            pl.BlockSpec((TM, K_PAD), lambda i: (i, 0)),
            # Weights / biases stay VMEM-resident across all grid steps.
            pl.BlockSpec((K_PAD, H_PAD), lambda i: (0, 0)),
            pl.BlockSpec((1, H_PAD), lambda i: (0, 0)),
            pl.BlockSpec((1, H_PAD), lambda i: (0, 0)),
            pl.BlockSpec((1, H_PAD), lambda i: (0, 0)),
        ],
        out_specs=pl.BlockSpec((TM, H_PAD), lambda i: (i, 0)),
        compiler_params=pltpu.CompilerParams(
            dimension_semantics=("parallel",)),   # shards batch across TCs on v7x
    )(x_p, wc_p, bc_p, wl_p, bl_p)

    return out_p[:N, :1]


def init_params(key):
    """Deterministic init mimicking PyTorch default (uniform +/- 1/sqrt(fan_in))."""
    k1, k2, k3, k4 = jax.random.split(key, 4)
    fan_in_conv = 3 * 10 * 10
    b_conv = 1.0 / jnp.sqrt(fan_in_conv)
    conv_w = jax.random.uniform(k1, (8, 3, 10, 10), jnp.float32, -b_conv, b_conv)
    conv_b = jax.random.uniform(k2, (8,), jnp.float32, -b_conv, b_conv)
    fan_in_lin = 8
    b_lin = 1.0 / jnp.sqrt(fan_in_lin)
    lin_w = jax.random.uniform(k3, (1, 8), jnp.float32, -b_lin, b_lin)
    lin_b = jax.random.uniform(k4, (1,), jnp.float32, -b_lin, b_lin)
    return conv_w, conv_b, lin_w, lin_b


if __name__ == "__main__":
    key = jax.random.PRNGKey(0)
    pk, xk = jax.random.split(key)
    conv_w, conv_b, lin_w, lin_b = init_params(pk)

    # One-time padded weight buffers (hoisted out of the per-call path).
    wc_p, bc_p, wl_p, bl_p = prepare_params(conv_w, conv_b, lin_w, lin_b)
    wc_p, bc_p, wl_p, bl_p = jax.block_until_ready((wc_p, bc_p, wl_p, bl_p))

    # Input implied by the module: spatial 10x10 so Conv2d(k=10) output
    # flattens to 8 features for Linear(8, 1).
    x = jax.random.normal(xk, (2, 3, 10, 10), jnp.float32)

    fwd = jax.jit(dummy_model_forward)
    out = jax.block_until_ready(fwd(x, wc_p, bc_p, wl_p, bl_p))

    # Reference check in plain JAX (same math, eval-mode dropout = identity).
    h_ref = jnp.maximum(x.reshape(2, -1) @ conv_w.reshape(8, -1).T + conv_b, 0.0)
    ref = h_ref @ lin_w.T + lin_b
    assert out.shape == (2, 1)
    assert jnp.allclose(out, ref, atol=1e-5, rtol=1e-5)

    print("KERNEL_OK")
</pallas_src>

<mosaic_0001>
module attributes {stable_mosaic.version = 11 : i64} {
  func.func @_fused_forward_kernel(%arg0: i32, %arg1: memref<8x384xf32, #tpu.memory_space<vmem>>, %arg2: memref<384x128xf32, #tpu.memory_space<vmem>>, %arg3: memref<1x128xf32, #tpu.memory_space<vmem>>, %arg4: memref<1x128xf32, #tpu.memory_space<vmem>>, %arg5: memref<1x128xf32, #tpu.memory_space<vmem>>, %arg6: memref<8x128xf32, #tpu.memory_space<vmem>>) attributes {dimension_semantics = [#tpu.dimension_semantics<parallel>], iteration_bounds = array<i64: 1>, scalar_prefetch = 0 : i64, scratch_operands = 0 : i64, tpu.core_type = #tpu.core_type<tc>, window_params = [{transform_indices = @transform_0, window_bounds = array<i64: 8, 384>}, {pipeline_mode = #tpu.pipeline_mode<synchronous>, transform_indices = @transform_1, window_bounds = array<i64: 384, 128>}, {pipeline_mode = #tpu.pipeline_mode<synchronous>, transform_indices = @transform_2, window_bounds = array<i64: 1, 128>}, {pipeline_mode = #tpu.pipeline_mode<synchronous>, transform_indices = @transform_3, window_bounds = array<i64: 1, 128>}, {pipeline_mode = #tpu.pipeline_mode<synchronous>, transform_indices = @transform_4, window_bounds = array<i64: 1, 128>}, {transform_indices = @transform_5, window_bounds = array<i64: 8, 128>}]} {
    %c0 = arith.constant 0 : index
    %c0_0 = arith.constant 0 : index
    %0 = vector.load %arg1[%c0, %c0_0] : memref<8x384xf32, #tpu.memory_space<vmem>>, vector<8x384xf32>
    %c0_1 = arith.constant 0 : index
    %c0_2 = arith.constant 0 : index
    %1 = vector.load %arg2[%c0_1, %c0_2] : memref<384x128xf32, #tpu.memory_space<vmem>>, vector<384x128xf32>
    %cst = arith.constant dense<0.000000e+00> : vector<8x128xf32>
    %2 = tpu.matmul %0, %1, %cst {dimension_numbers = #tpu.dot_dimension_numbers<[1], [0], [0], [1], [0, 0, 1, 1], [], []>} : vector<8x384xf32>, vector<384x128xf32>, vector<8x128xf32> -> vector<8x128xf32>
    %c0_3 = arith.constant 0 : index
    %c0_4 = arith.constant 0 : index
    %3 = vector.load %arg3[%c0_3, %c0_4] : memref<1x128xf32, #tpu.memory_space<vmem>>, vector<1x128xf32>
    %4 = vector.broadcast %3 : vector<1x128xf32> to vector<8x128xf32>
    %5 = arith.addf %2, %4 : vector<8x128xf32>
    %cst_5 = arith.constant 0.000000e+00 : f32
    %6 = vector.broadcast %cst_5 : f32 to vector<8x128xf32>
    %7 = arith.maximumf %5, %6 : vector<8x128xf32>
    %c0_6 = arith.constant 0 : index
    %c0_7 = arith.constant 0 : index
    %8 = vector.load %arg4[%c0_6, %c0_7] : memref<1x128xf32, #tpu.memory_space<vmem>>, vector<1x128xf32>
    %9 = vector.broadcast %8 : vector<1x128xf32> to vector<8x128xf32>
    %10 = arith.mulf %7, %9 : vector<8x128xf32>
    %cst_8 = arith.constant dense<0.000000e+00> : vector<8xf32>
    %11 = vector.multi_reduction <add>, %10, %cst_8 [1] : vector<8x128xf32> to vector<8xf32>
    %12 = vector.shape_cast %11 : vector<8xf32> to vector<8x1xf32>
    %c0_9 = arith.constant 0 : index
    %c0_10 = arith.constant 0 : index
    %13 = vector.load %arg5[%c0_9, %c0_10] : memref<1x128xf32, #tpu.memory_space<vmem>>, vector<1x128xf32>
    %14 = vector.broadcast %12 : vector<8x1xf32> to vector<8x128xf32>
    %15 = vector.broadcast %13 : vector<1x128xf32> to vector<8x128xf32>
    %16 = arith.addf %14, %15 : vector<8x128xf32>
    %c0_11 = arith.constant 0 : index
    %c0_12 = arith.constant 0 : index
    %17 = vector.load %arg6[%c0_11, %c0_12] : memref<8x128xf32, #tpu.memory_space<vmem>>, vector<8x128xf32>
    tpu.vector_store %arg6[%c0_11, %c0_12], %16 {strides = array<i32>} : memref<8x128xf32, #tpu.memory_space<vmem>>, vector<8x128xf32>,
    return
  }
  func.func @transform_0(%arg0: i32) -> (i32, i32) {
    %c0_i32 = arith.constant 0 : i32
    %c0_i32_0 = arith.constant 0 : i32
    return %arg0, %c0_i32 : i32, i32
  }
  func.func @transform_1(%arg0: i32) -> (i32, i32) {
    %c0_i32 = arith.constant 0 : i32
    %c0_i32_0 = arith.constant 0 : i32
    %c0_i32_1 = arith.constant 0 : i32
    return %c0_i32, %c0_i32_0 : i32, i32
  }
  func.func @transform_2(%arg0: i32) -> (i32, i32) {
    %c0_i32 = arith.constant 0 : i32
    %c0_i32_0 = arith.constant 0 : i32
    %c0_i32_1 = arith.constant 0 : i32
    return %c0_i32, %c0_i32_0 : i32, i32
  }
  func.func @transform_3(%arg0: i32) -> (i32, i32) {
    %c0_i32 = arith.constant 0 : i32
    %c0_i32_0 = arith.constant 0 : i32
    %c0_i32_1 = arith.constant 0 : i32
    return %c0_i32, %c0_i32_0 : i32, i32
  }
  func.func @transform_4(%arg0: i32) -> (i32, i32) {
    %c0_i32 = arith.constant 0 : i32
    %c0_i32_0 = arith.constant 0 : i32
    %c0_i32_1 = arith.constant 0 : i32
    return %c0_i32, %c0_i32_0 : i32, i32
  }
  func.func @transform_5(%arg0: i32) -> (i32, i32) {
    %c0_i32 = arith.constant 0 : i32
    %c0_i32_0 = arith.constant 0 : i32
    return %arg0, %c0_i32 : i32, i32
  }
}

</mosaic_0001>

<llo_original>
// kernel: dummy_model_forward.1
$region0: #{dummy_model_forward.1}
  #allocation0 [shape = 'u32[]', space=smem, size = 0x4, offset = 0x4, fixed_abs, tag = 'smem constant byte address 0x4 - core index']
  #allocation1 [shape = 'u32[144,128]{1,0:T(1,128)}', space=vmem, size = 0x12000, scoped, tag = 'internal scratch']
  %s0 = inlined_call_operand.vmem [shape: f32[8,384], index: 0, kind: input, shape index: {}]
  %s1 = inlined_call_operand.hbm [shape: f32[384,128], index: 1, kind: input, shape index: {}]
  %s2 = inlined_call_operand.vmem [shape: f32[1,128], index: 2, kind: input, shape index: {}]
  %s3 = inlined_call_operand.vmem [shape: f32[1,128], index: 3, kind: input, shape index: {}]
  %s4 = inlined_call_operand.vmem [shape: f32[1,128], index: 4, kind: input, shape index: {}]
  %s5 = inlined_call_operand.vmem [shape: f32[8,128], index: 5, kind: output, shape index: {}]
  %s6 = sld [smem:[#allocation0]]
  $region34: #{dummy_model_forward.1} parent=0
    _
  %s8 = ssub.s32 1, %s6
  %s9 = scalar_select 0, %s8, %s6
  $region1: #{dummy_model_forward.1} parent=0
    #allocation2 [shape = 'u8[196608]{0}', space=vmem, size = 0x30000, scoped, tag = 'input window, operand 1, single buffered']
    #allocation3 [shape = 's32[1]{0}', space=sflag, size = 0x4, scoped, tag = 'scoped memory for dummy_model_forward.1']
    %10 = vsyncpa [#allocation3], 0
    // Predicated region
    $region2: #{dummy_model_forward.1} parent=1 // pred_check
      _
    $region3: #{dummy_model_forward.1} parent=1 // pred_check_branch
      %12 = sbr.rel (0) target = $region5
    $region4: #{dummy_model_forward.1} parent=1 // pred_region
      _
    $region5: #{dummy_model_forward.1} parent=1 // pred_fallthru
      _
    // Predicated region
    $region6: #{dummy_model_forward.1} parent=1 // pred_check
      _
    $region7: #{dummy_model_forward.1} parent=1 // pred_check_branch
      %14 = sbr.rel (0) target = $region9
    $region8: #{dummy_model_forward.1} parent=1 // pred_region
      %s16 = ssub.s32 6144, 6144
      %17 = vsyncadd [#allocation3], %s16
      %s18 = sshll.u32 [#allocation2], 4
      %s19 = int_to_ptr.vmem [resolvable:$true] %s18
      %24 = dma.hbm_to_vmem [thread:$0]  %s1, 6144, %s19, [#allocation3], 128, 128, 8
    $region9: #{dummy_model_forward.1} parent=1 // pred_fallthru
      _
    // Predicated region
    $region10: #{dummy_model_forward.1} parent=1 // pred_check
      _
    $region11: #{dummy_model_forward.1} parent=1 // pred_check_branch
      %26 = sbr.rel (0) target = $region13
    $region12: #{dummy_model_forward.1} parent=1 // pred_region
      _
    $region13: #{dummy_model_forward.1} parent=1 // pred_fallthru
      _
    // Predicated region
    $region14: #{dummy_model_forward.1} parent=1 // pred_check
      _
    $region15: #{dummy_model_forward.1} parent=1 // pred_check_branch
      %28 = sbr.rel (0) target = $region17
    $region16: #{dummy_model_forward.1} parent=1 // pred_region
      _
    $region17: #{dummy_model_forward.1} parent=1 // pred_fallthru
      _
    // Predicated region
    $region18: #{dummy_model_forward.1} parent=1 // pred_check
      _
    $region19: #{dummy_model_forward.1} parent=1 // pred_check_branch
      %30 = sbr.rel (0) target = $region21
    $region20: #{dummy_model_forward.1} parent=1 // pred_region
      _
    $region21: #{dummy_model_forward.1} parent=1 // pred_fallthru
      _
    // Predicated region
    $region22: #{dummy_model_forward.1} parent=1 // pred_check
      _
    $region23: #{dummy_model_forward.1} parent=1 // pred_check_branch
      %32 = sbr.rel (0) target = $region25
    $region24: #{dummy_model_forward.1} parent=1 // pred_region
      %33 = dma.done [#allocation3], 6144
    $region25: #{dummy_model_forward.1} parent=1 // pred_fallthru
      _
    %v34 = vld [vmem:[%s0] sm:$0xff]
    %v35 = vld [vmem:[%s0 + $0x8] sm:$0xff]
    %v36 = vld [vmem:[%s0 + $0x10] sm:$0xff]
    %v37 = vld [vmem:[#allocation2] sm:$0xff]
    %v38 = vld [vmem:[#allocation2 + $0x8] sm:$0xff]
    %v39 = vld [vmem:[#allocation2 + $0x10] sm:$0xff]
    %v40 = vld [vmem:[#allocation2 + $0x18] sm:$0xff]
    %v41 = vld [vmem:[#allocation2 + $0x20] sm:$0xff]
    %v42 = vld [vmem:[#allocation2 + $0x28] sm:$0xff]
    %v43 = vld [vmem:[#allocation2 + $0x30] sm:$0xff]
    %v44 = vld [vmem:[#allocation2 + $0x38] sm:$0xff]
    %v45 = vld [vmem:[#allocation2 + $0x40] sm:$0xff]
    %v46 = vld [vmem:[#allocation2 + $0x48] sm:$0xff]
    %v47 = vld [vmem:[#allocation2 + $0x50] sm:$0xff]
    %v48 = vld [vmem:[#allocation2 + $0x58] sm:$0xff]
    %v49 = vld [vmem:[#allocation2 + $0x60] sm:$0xff]
    %v50 = vld [vmem:[#allocation2 + $0x68] sm:$0xff]
    %v51 = vld [vmem:[#allocation2 + $0x70] sm:$0xff]
    %v52 = vld [vmem:[#allocation2 + $0x78] sm:$0xff]
    %v53 = vld [vmem:[#allocation2 + $0x80] sm:$0xff]
    %v54 = vld [vmem:[#allocation2 + $0x88] sm:$0xff]
    %v55 = vld [vmem:[#allocation2 + $0x90] sm:$0xff]
    %v56 = vld [vmem:[#allocation2 + $0x98] sm:$0xff]
    %v57 = vld [vmem:[#allocation2 + $0xa0] sm:$0xff]
    %v58 = vld [vmem:[#allocation2 + $0xa8] sm:$0xff]
    %v59 = vld [vmem:[#allocation2 + $0xb0] sm:$0xff]
    %v60 = vld [vmem:[#allocation2 + $0xb8] sm:$0xff]
    %v61 = vld [vmem:[#allocation2 + $0xc0] sm:$0xff]
    %v62 = vld [vmem:[#allocation2 + $0xc8] sm:$0xff]
    %v63 = vld [vmem:[#allocation2 + $0xd0] sm:$0xff]
    %v64 = vld [vmem:[#allocation2 + $0xd8] sm:$0xff]
    %v65 = vld [vmem:[#allocation2 + $0xe0] sm:$0xff]
    %v66 = vld [vmem:[#allocation2 + $0xe8] sm:$0xff]
    %v67 = vld [vmem:[#allocation2 + $0xf0] sm:$0xff]
    %v68 = vld [vmem:[#allocation2 + $0xf8] sm:$0xff]
    %v69 = vld [vmem:[#allocation2 + $0x100] sm:$0xff]
    %v70 = vld [vmem:[#allocation2 + $0x108] sm:$0xff]
    %v71 = vld [vmem:[#allocation2 + $0x110] sm:$0xff]
    %v72 = vld [vmem:[#allocation2 + $0x118] sm:$0xff]
    %v73 = vld [vmem:[#allocation2 + $0x120] sm:$0xff]
    %v74 = vld [vmem:[#allocation2 + $0x128] sm:$0xff]
    %v75 = vld [vmem:[#allocation2 + $0x130] sm:$0xff]
    %v76 = vld [vmem:[#allocation2 + $0x138] sm:$0xff]
    %v77 = vld [vmem:[#allocation2 + $0x140] sm:$0xff]
    %v78 = vld [vmem:[#allocation2 + $0x148] sm:$0xff]
    %v79 = vld [vmem:[#allocation2 + $0x150] sm:$0xff]
    %v80 = vld [vmem:[#allocation2 + $0x158] sm:$0xff]
    %v81 = vld [vmem:[#allocation2 + $0x160] sm:$0xff]
    %v82 = vld [vmem:[#allocation2 + $0x168] sm:$0xff]
    %v83 = vld [vmem:[#allocation2 + $0x170] sm:$0xff]
    %v84 = vld [vmem:[#allocation2 + $0x178] sm:$0xff]
    %v85 = vld [vmem:[%s2] sm:$0x1]
    %v87 = vlaneseq
    %v88 = vshrl.u32 %v87, 7
    %v89 = vsub.s32 0, %v88
    %v90 = vrot.slane %v85, %v89
    %92 = vmatprep.subr.mxu0 0.0
    %93 = vmatpush1.msra.mxu0 %v37
    %94 = vmatprep.subr.mxu0 0.0
    %95 = vmatpush1.msra.mxu0 %v38
    %96 = vmatprep.subr.mxu0 0.0
    %97 = vmatpush1.msra.mxu0 %v39
    %98 = vmatprep.subr.mxu0 0.0
    %99 = vmatpush1.msra.mxu0 %v40
    %100 = vmatprep.subr.mxu0 0.0
    %101 = vmatpush1.msra.mxu0 %v41
    %102 = vmatprep.subr.mxu0 0.0
    %103 = vmatpush1.msra.mxu0 %v42
    %104 = vmatprep.subr.mxu0 0.0
    %105 = vmatpush1.msra.mxu0 %v43
    %106 = vmatprep.subr.mxu0 0.0
    %107 = vmatpush1.msra.mxu0 %v44
    %108 = vmatprep.subr.mxu0 0.0
    %109 = vmatpush1.msra.mxu0 %v45
    %110 = vmatprep.subr.mxu0 0.0
    %111 = vmatpush1.msra.mxu0 %v46
    %112 = vmatprep.subr.mxu0 0.0
    %113 = vmatpush1.msra.mxu0 %v47
    %114 = vmatprep.subr.mxu0 0.0
    %115 = vmatpush1.msra.mxu0 %v48
    %116 = vmatprep.subr.mxu0 0.0
    %117 = vmatpush1.msra.mxu0 %v49
    %118 = vmatprep.subr.mxu0 0.0
    %119 = vmatpush1.msra.mxu0 %v50
    %120 = vmatprep.subr.mxu0 0.0
    %121 = vmatpush1.msra.mxu0 %v51
    %122 = vmatprep.subr.mxu0 0.0
    %123 = vmatpush1.msra.mxu0 %v52
    %124 = vmatprep.subr.mxu0 0.0
    %125 = vmatpush1.msra.mxu0 %v53
    %126 = vmatprep.subr.mxu0 0.0
    %127 = vmatpush1.msra.mxu0 %v54
    %128 = vmatprep.subr.mxu0 0.0
    %129 = vmatpush1.msra.mxu0 %v55
    %130 = vmatprep.subr.mxu0 0.0
    %131 = vmatpush1.msra.mxu0 %v56
    %132 = vmatprep.subr.mxu0 0.0
    %133 = vmatpush1.msra.mxu0 %v57
    %134 = vmatprep.subr.mxu0 0.0
    %135 = vmatpush1.msra.mxu0 %v58
    %136 = vmatprep.subr.mxu0 0.0
    %137 = vmatpush1.msra.mxu0 %v59
    %138 = vmatprep.subr.mxu0 0.0
    %139 = vmatpush1.msra.mxu0 %v60
    %140 = vmatprep.subr.mxu0 0.0
    %141 = vmatpush1.msra.mxu0 %v61
    %142 = vmatprep.subr.mxu0 0.0
    %143 = vmatpush1.msra.mxu0 %v62
    %144 = vmatprep.subr.mxu0 0.0
    %145 = vmatpush1.msra.mxu0 %v63
    %146 = vmatprep.subr.mxu0 0.0
    %147 = vmatpush1.msra.mxu0 %v64
    %148 = vmatprep.subr.mxu0 0.0
    %149 = vmatpush1.msra.mxu0 %v65
    %150 = vmatprep.subr.mxu0 0.0
    %151 = vmatpush1.msra.mxu0 %v66
    %152 = vmatprep.subr.mxu0 0.0
    %153 = vmatpush1.msra.mxu0 %v67
    %154 = vmatprep.subr.mxu0 0.0
    %155 = vmatpush1.msra.mxu0 %v68
    %156 = vmatprep.mubr.f32.mxu0 %v35
    %157 = vmatmul.mubr.f32.gmra.mrb[0].mxu0 %v34
    %v158 = vpop.f32.mrb[0].mxu0
    %v159 = vadd.f32 %v90, %v158
    %v160 = vpop.f32.mrb[0].mxu0
    %161 = vdwg.mxu0
    %162 = vmatprep.subr.mxu0 0.0
    %163 = vmatpush1.msra.mxu0 %v69
    %164 = vmatprep.subr.mxu0 0.0
    %165 = vmatpush1.msra.mxu0 %v70
    %166 = vmatprep.subr.mxu0 0.0
    %167 = vmatpush1.msra.mxu0 %v71
    %168 = vmatprep.subr.mxu0 0.0
    %169 = vmatpush1.msra.mxu0 %v72
    %170 = vmatprep.subr.mxu0 0.0
    %171 = vmatpush1.msra.mxu0 %v73
    %172 = vmatprep.subr.mxu0 0.0
    %173 = vmatpush1.msra.mxu0 %v74
    %174 = vmatprep.subr.mxu0 0.0
    %175 = vmatpush1.msra.mxu0 %v75
    %176 = vmatprep.subr.mxu0 0.0
    %177 = vmatpush1.msra.mxu0 %v76
    %178 = vmatprep.subr.mxu0 0.0
    %179 = vmatpush1.msra.mxu0 %v77
    %180 = vmatprep.subr.mxu0 0.0
    %181 = vmatpush1.msra.mxu0 %v78
    %182 = vmatprep.subr.mxu0 0.0
    %183 = vmatpush1.msra.mxu0 %v79
    %184 = vmatprep.subr.mxu0 0.0
    %185 = vmatpush1.msra.mxu0 %v80
    %186 = vmatprep.subr.mxu0 0.0
    %187 = vmatpush1.msra.mxu0 %v81
    %188 = vmatprep.subr.mxu0 0.0
    %189 = vmatpush1.msra.mxu0 %v82
    %190 = vmatprep.subr.mxu0 0.0
    %191 = vmatpush1.msra.mxu0 %v83
    %192 = vmatprep.subr.mxu0 0.0
    %193 = vmatpush1.msra.mxu0 %v84
    %194 = vmatprep.subr.mxu0 0.0
    %195 = vmatpush1.msra.mxu0 0.0
    %196 = vmatprep.subr.mxu0 0.0
    %197 = vmatpush1.msra.mxu0 0.0
    %198 = vmatprep.subr.mxu0 0.0
    %199 = vmatpush1.msra.mxu0 0.0
    %200 = vmatprep.subr.mxu0 0.0
    %201 = vmatpush1.msra.mxu0 0.0
    %202 = vmatprep.subr.mxu0 0.0
    %203 = vmatpush1.msra.mxu0 0.0
    %204 = vmatprep.subr.mxu0 0.0
    %205 = vmatpush1.msra.mxu0 0.0
    %206 = vmatprep.subr.mxu0 0.0
    %207 = vmatpush1.msra.mxu0 0.0
    %208 = vmatprep.subr.mxu0 0.0
    %209 = vmatpush1.msra.mxu0 0.0
    %210 = vmatprep.subr.mxu0 0.0
    %211 = vmatpush1.msra.mxu0 0.0
    %212 = vmatprep.subr.mxu0 0.0
    %213 = vmatpush1.msra.mxu0 0.0
    %214 = vmatprep.subr.mxu0 0.0
    %215 = vmatpush1.msra.mxu0 0.0
    %216 = vmatprep.subr.mxu0 0.0
    %217 = vmatpush1.msra.mxu0 0.0
    %218 = vmatprep.subr.mxu0 0.0
    %219 = vmatpush1.msra.mxu0 0.0
    %220 = vmatprep.subr.mxu0 0.0
    %221 = vmatpush1.msra.mxu0 0.0
    %222 = vmatprep.subr.mxu0 0.0
    %223 = vmatpush1.msra.mxu0 0.0
    %224 = vmatprep.subr.mxu0 0.0
    %225 = vmatpush1.msra.mxu0 0.0
    %226 = vmatprep.mubr.f32.mxu0 0.0
    %227 = vmatmul.mubr.f32.gmra.mrb[0].mxu0 %v36
    %v228 = vpop.f32.mrb[0].mxu0
    %v229 = vadd.f32 %v159, %v228
    %v230 = vpop.f32.mrb[0].mxu0
    %231 = vdwg.mxu0
    %v232 = vmax.f32 %v229, 0.0
    %v233 = vld [vmem:[%s3] sm:$0x1]
    %v235 = vlaneseq
    %v236 = vshrl.u32 %v235, 7
    %v237 = vsub.s32 0, %v236
    %v238 = vrot.slane %v233, %v237
    %v240 = vmul.f32 %v232, %v238
    %241 = vadd.xlane.f32.xlu0 %v240
    %v242 = vpop.xlane.xlu0 %241
    %v243 = vld [vmem:[%s4] sm:$0x1]
    %v245 = vlaneseq
    %v246 = vshrl.u32 %v245, 7
    %v247 = vsub.s32 0, %v246
    %v248 = vrot.slane %v243, %v247
    %v250 = vadd.f32 %v242, %v248
    %251 = vst [vmem:[%s5] sm:$0xff] %v250
    // Predicated region
    $region26: #{dummy_model_forward.1} parent=1 // pred_check
      _
    $region27: #{dummy_model_forward.1} parent=1 // pred_check_branch
      %253 = sbr.rel (0) target = $region29
    $region28: #{dummy_model_forward.1} parent=1 // pred_region
      _
    $region29: #{dummy_model_forward.1} parent=1 // pred_fallthru
      _
    // Predicated region
    $region30: #{dummy_model_forward.1} parent=1 // pred_check
      _
    $region31: #{dummy_model_forward.1} parent=1 // pred_check_branch
      %255 = sbr.rel (0) target = $region33
    $region32: #{dummy_model_forward.1} parent=1 // pred_region
      _
    $region33: #{dummy_model_forward.1} parent=1 // pred_fallthru
      _
    %256 = vsyncpa [#allocation3], 1

</llo_original>
